<compile_context>
chip_gen: v5e
topology: v5e:2x2
jax: 0.10.0
libtpu: 0.0.40
codegen_flags: <defaults>
</compile_context>

<pallas_src>
import functools

import jax
import jax.numpy as jnp
from jax.experimental import pallas as pl
from jax.experimental.pallas import tpu as pltpu


def _nt_xent_kernel(xq_ref, xk_ref, loss_ref,
                    qn_f32_ref, qn_bf16_ref, rowsum_ref, pair_ref, *,
                    temperature, n, b, tile):
    """Grid point (i, j): q-row tile i vs. k-column tile j of the sim matrix."""
    j = pl.program_id(1)
    num_j = n // tile
    inv_t = 1.0 / float(temperature)

    @pl.when(j == 0)
    def _():
        # Normalize the q row-tile once per row sweep and cache it:
        # f32 copy for the (log-space) positive-pair dot, bf16 copy for the MXU.
        xq = xq_ref[...].astype(jnp.float32)
        qn = xq * jax.lax.rsqrt(jnp.sum(xq * xq, axis=1, keepdims=True))
        qn_f32_ref[...] = qn
        qn_bf16_ref[...] = qn.astype(jnp.bfloat16)
        rowsum_ref[...] = jnp.zeros_like(rowsum_ref)

    # Normalize the streamed k column-tile (rsqrt -> EUP slot; no VALU divide).
    xk = xk_ref[...].astype(jnp.float32)
    kn = xk * jax.lax.rsqrt(jnp.sum(xk * xk, axis=1, keepdims=True))

    # (tile, tile) similarity block on the MXU: bf16 operands, f32 accumulation.
    sim = jax.lax.dot_general(
        qn_bf16_ref[...], kn.astype(jnp.bfloat16),
        (((1,), (1,)), ((), ())), preferred_element_type=jnp.float32)

    # exp((sim - 1)/t) is overflow-safe (sim <= 1); the exp(1/t) factor is folded
    # back in analytically in the epilogue.
    rowsum_ref[...] += jnp.sum(jnp.exp((sim - 1.0) * inv_t), axis=1, keepdims=True)

    # Positive-pair similarity (the numerator, kept in log space: never exp'd).
    if tile == n:
        # Single tile: partner of local row l is (l + b) mod n -> sublane roll.
        # n == 2*b, so the roll direction is irrelevant.
        pair_ref[...] = jnp.sum(qn_f32_ref[...] * pltpu.roll(kn, shift=b, axis=0),
                                axis=1, keepdims=True)
    else:
        # tile | b, so the partner rows of q-tile i are exactly k-tile
        # (i + b // tile) mod num_j, in the same local row order.
        i = pl.program_id(0)
        partner_j = (i + (b // tile)) % num_j

        @pl.when(j == partner_j)
        def _():
            pair_ref[...] = jnp.sum(qn_f32_ref[...] * kn, axis=1, keepdims=True)

    @pl.when(j == num_j - 1)
    def _():
        # denominator / exp(1/t): accumulated row sum minus the diagonal exp(0)=1.
        den = jnp.maximum(rowsum_ref[...] - 1.0, 1e-30)
        # -log(num/den_full) = 1/t + log(den) - sim_pair / t
        loss_ref[...] = inv_t + jnp.log(den) - pair_ref[...] * inv_t


def _pick_tile(n, b, d):
    """Largest tile (divides B, sublane-aligned) whose working set fits VMEM."""
    budget = 30 * 1024 * 1024  # stay under the default scoped VMEM limit

    def fits(t):
        in_blocks = 2 * 2 * t * d * 4            # 2 inputs, double-buffered, f32
        scratch = t * d * (4 + 2) + 2 * t * 4    # qn f32 + qn bf16 + rowsum + pair
        sim = 2 * t * t * 4                      # sim tile + exp intermediate (f32)
        return in_blocks + scratch + sim <= budget

    if fits(n):
        return n
    for t in (1024, 512, 256, 128, 64, 32, 16, 8):
        if b % t == 0 and fits(t):
            return t
    # TODO(synk): awkward batch sizes (B not a multiple of 8) fall back to a
    # single block and may need a raised vmem_limit_bytes for very large N*D.
    return n


def nt_xent_loss(embeddings, temperature, *, tile=None):
    """embeddings: (2*B, D) float array. Returns scalar float32 loss."""
    n, d = embeddings.shape
    b = n // 2
    assert n == 2 * b, "NT-Xent expects an even number of rows (2 * batch)."

    if tile is None:
        tile = _pick_tile(n, b, d)
    if tile != n:
        assert b % tile == 0 and tile % 8 == 0, (tile, b)
    num_tiles = n // tile

    kernel = functools.partial(
        _nt_xent_kernel, temperature=float(temperature), n=n, b=b, tile=tile)

    loss_rows = pl.pallas_call(
        kernel,
        out_shape=jax.ShapeDtypeStruct((n, 1), jnp.float32),
        grid_spec=pltpu.PrefetchScalarGridSpec(
            num_scalar_prefetch=0,
            grid=(num_tiles, num_tiles),
            in_specs=[
                pl.BlockSpec((tile, d), lambda i, j: (i, 0)),   # q rows
                pl.BlockSpec((tile, d), lambda i, j: (j, 0)),   # k rows
            ],
            out_specs=pl.BlockSpec((tile, 1), lambda i, j: (i, 0)),
            scratch_shapes=[
                pltpu.VMEM((tile, d), jnp.float32),    # cached normalized q (f32)
                pltpu.VMEM((tile, d), jnp.bfloat16),   # cached normalized q (bf16)
                pltpu.VMEM((tile, 1), jnp.float32),    # running row-sum of exp
                pltpu.VMEM((tile, 1), jnp.float32),    # positive-pair similarity
            ],
        ),
        compiler_params=pltpu.CompilerParams(
            dimension_semantics=("parallel", "arbitrary")),
    )(embeddings, embeddings)

    # Tiny (N,)-element reduction done outside the kernel so the row axis can be
    # 'parallel' (megacore / 2 TCs on v7x) without racing on a shared scalar.
    return jnp.sum(loss_rows) / n


def _reference_loss(embeddings, temperature):
    # Pure-JAX mirror of the PyTorch forward, for a sanity check.
    n, _ = embeddings.shape
    b = n // 2
    e = embeddings / jnp.linalg.norm(embeddings, axis=1, keepdims=True)
    arrange = jnp.stack([jnp.arange(b), jnp.arange(b) + b], axis=1).reshape(-1)
    e = e[arrange]
    sim = jnp.exp((e @ e.T) / temperature)
    rows = jnp.arange(n)
    partner = rows + 1 - 2 * (rows % 2)
    num = sim[rows, partner]
    den = sim.sum(axis=1) - jnp.diag(sim)
    return jnp.sum(-jnp.log(num / den)) / n


if __name__ == "__main__":
    key = jax.random.PRNGKey(0)
    temperature = 0.5
    k1, k2 = jax.random.split(key)

    # 1) Small single-block case (grid (1, 1)): B=4, D=32 -> embeddings (8, 32).
    emb_small = jax.random.normal(k1, (8, 32), dtype=jnp.float32)
    loss_small = jax.block_until_ready(nt_xent_loss(emb_small, temperature))
    ref_small = _reference_loss(emb_small, temperature)
    # bf16 MXU operands => looser tolerance than the pure-f32 reference.
    assert jnp.allclose(loss_small, ref_small, rtol=3e-2, atol=3e-2), (
        loss_small, ref_small)

    # 2) Tiled (flash-style) path: B=128, D=128, tile=64 -> grid (4, 4).
    emb_big = jax.random.normal(k2, (256, 128), dtype=jnp.float32)
    loss_big = jax.block_until_ready(nt_xent_loss(emb_big, temperature, tile=64))
    ref_big = _reference_loss(emb_big, temperature)
    assert jnp.allclose(loss_big, ref_big, rtol=3e-2, atol=3e-2), (
        loss_big, ref_big)

    print("KERNEL_OK")
</pallas_src>

<mosaic_0001>
module attributes {stable_mosaic.version = 11 : i64} {
  func.func @_nt_xent_kernel(%arg0: i32, %arg1: i32, %arg2: memref<8x32xf32, #tpu.memory_space<vmem>>, %arg3: memref<8x32xf32, #tpu.memory_space<vmem>>, %arg4: memref<8x1xf32, #tpu.memory_space<vmem>>, %arg5: memref<8x32xf32, #tpu.memory_space<vmem>>, %arg6: memref<8x32xbf16, #tpu.memory_space<vmem>>, %arg7: memref<8x1xf32, #tpu.memory_space<vmem>>, %arg8: memref<8x1xf32, #tpu.memory_space<vmem>>) attributes {dimension_semantics = [#tpu.dimension_semantics<parallel>, #tpu.dimension_semantics<arbitrary>], iteration_bounds = array<i64: 1, 1>, scalar_prefetch = 0 : i64, scratch_operands = 4 : i64, tpu.core_type = #tpu.core_type<tc>, window_params = [{transform_indices = @transform_0, window_bounds = array<i64: 8, 32>}, {transform_indices = @transform_1, window_bounds = array<i64: 8, 32>}, {transform_indices = @transform_2, window_bounds = array<i64: 8, 1>}]} {
    %c0_i32 = arith.constant 0 : i32
    %0 = arith.cmpi eq, %arg1, %c0_i32 : i32
    %1 = arith.extui %0 : i1 to i32
    %c0_i32_0 = arith.constant 0 : i32
    %2 = arith.cmpi ne, %1, %c0_i32_0 : i32
    scf.if %2 {
      %c0_19 = arith.constant 0 : index
      %c0_20 = arith.constant 0 : index
      %32 = vector.load %arg2[%c0_19, %c0_20] : memref<8x32xf32, #tpu.memory_space<vmem>>, vector<8x32xf32>
      %33 = arith.mulf %32, %32 : vector<8x32xf32>
      %cst_21 = arith.constant dense<0.000000e+00> : vector<8xf32>
      %34 = vector.multi_reduction <add>, %33, %cst_21 [1] : vector<8x32xf32> to vector<8xf32>
      %35 = vector.shape_cast %34 : vector<8xf32> to vector<8x1xf32>
      %36 = math.rsqrt %35 : vector<8x1xf32>
      %37 = vector.broadcast %36 : vector<8x1xf32> to vector<8x32xf32>
      %38 = arith.mulf %32, %37 : vector<8x32xf32>
      %c0_22 = arith.constant 0 : index
      %c0_23 = arith.constant 0 : index
      %39 = vector.load %arg5[%c0_22, %c0_23] : memref<8x32xf32, #tpu.memory_space<vmem>>, vector<8x32xf32>
      tpu.vector_store %arg5[%c0_22, %c0_23], %38 {strides = array<i32>} : memref<8x32xf32, #tpu.memory_space<vmem>>, vector<8x32xf32>,
      %40 = arith.truncf %38 : vector<8x32xf32> to vector<8x32xbf16>
      %c0_24 = arith.constant 0 : index
      %c0_25 = arith.constant 0 : index
      %41 = vector.load %arg6[%c0_24, %c0_25] : memref<8x32xbf16, #tpu.memory_space<vmem>>, vector<8x32xbf16>
      tpu.vector_store %arg6[%c0_24, %c0_25], %40 {strides = array<i32>} : memref<8x32xbf16, #tpu.memory_space<vmem>>, vector<8x32xbf16>,
      %cst_26 = arith.constant 0.000000e+00 : f32
      %42 = vector.broadcast %cst_26 : f32 to vector<8x1xf32>
      %c0_27 = arith.constant 0 : index
      %c0_28 = arith.constant 0 : index
      %43 = vector.load %arg7[%c0_27, %c0_28] : memref<8x1xf32, #tpu.memory_space<vmem>>, vector<8x1xf32>
      tpu.vector_store %arg7[%c0_27, %c0_28], %42 {strides = array<i32>} : memref<8x1xf32, #tpu.memory_space<vmem>>, vector<8x1xf32>,
    } else {
    }
    %c0 = arith.constant 0 : index
    %c0_1 = arith.constant 0 : index
    %3 = vector.load %arg3[%c0, %c0_1] : memref<8x32xf32, #tpu.memory_space<vmem>>, vector<8x32xf32>
    %4 = arith.mulf %3, %3 : vector<8x32xf32>
    %cst = arith.constant dense<0.000000e+00> : vector<8xf32>
    %5 = vector.multi_reduction <add>, %4, %cst [1] : vector<8x32xf32> to vector<8xf32>
    %6 = vector.shape_cast %5 : vector<8xf32> to vector<8x1xf32>
    %7 = math.rsqrt %6 : vector<8x1xf32>
    %8 = vector.broadcast %7 : vector<8x1xf32> to vector<8x32xf32>
    %9 = arith.mulf %3, %8 : vector<8x32xf32>
    %c0_2 = arith.constant 0 : index
    %c0_3 = arith.constant 0 : index
    %10 = vector.load %arg6[%c0_2, %c0_3] : memref<8x32xbf16, #tpu.memory_space<vmem>>, vector<8x32xbf16>
    %11 = arith.truncf %9 : vector<8x32xf32> to vector<8x32xbf16>
    %cst_4 = arith.constant dense<0.000000e+00> : vector<8x8xf32>
    %12 = tpu.matmul %10, %11, %cst_4 {dimension_numbers = #tpu.dot_dimension_numbers<[1], [1], [0], [0], [0, 0, 1, 0], [], []>} : vector<8x32xbf16>, vector<8x32xbf16>, vector<8x8xf32> -> vector<8x8xf32>
    %c0_5 = arith.constant 0 : index
    %c0_6 = arith.constant 0 : index
    %13 = vector.load %arg7[%c0_5, %c0_6] : memref<8x1xf32, #tpu.memory_space<vmem>>, vector<8x1xf32>
    %cst_7 = arith.constant 1.000000e+00 : f32
    %14 = vector.broadcast %cst_7 : f32 to vector<8x8xf32>
    %15 = arith.subf %12, %14 : vector<8x8xf32>
    %cst_8 = arith.constant 2.000000e+00 : f32
    %16 = vector.broadcast %cst_8 : f32 to vector<8x8xf32>
    %17 = arith.mulf %15, %16 : vector<8x8xf32>
    %18 = math.exp %17 : vector<8x8xf32>
    %cst_9 = arith.constant dense<0.000000e+00> : vector<8xf32>
    %19 = vector.multi_reduction <add>, %18, %cst_9 [1] : vector<8x8xf32> to vector<8xf32>
    %20 = vector.shape_cast %19 : vector<8xf32> to vector<8x1xf32>
    %21 = arith.addf %13, %20 : vector<8x1xf32>
    %c0_10 = arith.constant 0 : index
    %c0_11 = arith.constant 0 : index
    %22 = vector.load %arg7[%c0_10, %c0_11] : memref<8x1xf32, #tpu.memory_space<vmem>>, vector<8x1xf32>
    tpu.vector_store %arg7[%c0_10, %c0_11], %21 {strides = array<i32>} : memref<8x1xf32, #tpu.memory_space<vmem>>, vector<8x1xf32>,
    %c0_12 = arith.constant 0 : index
    %c0_13 = arith.constant 0 : index
    %23 = vector.load %arg5[%c0_12, %c0_13] : memref<8x32xf32, #tpu.memory_space<vmem>>, vector<8x32xf32>
    %c4_i32 = arith.constant 4 : i32
    %24 = tpu.dynamic_rotate %9 by %c4_i32 dim 0 : vector<8x32xf32>, i32 -> vector<8x32xf32>
    %25 = arith.mulf %23, %24 : vector<8x32xf32>
    %cst_14 = arith.constant dense<0.000000e+00> : vector<8xf32>
    %26 = vector.multi_reduction <add>, %25, %cst_14 [1] : vector<8x32xf32> to vector<8xf32>
    %27 = vector.shape_cast %26 : vector<8xf32> to vector<8x1xf32>
    %c0_15 = arith.constant 0 : index
    %c0_16 = arith.constant 0 : index
    %28 = vector.load %arg8[%c0_15, %c0_16] : memref<8x1xf32, #tpu.memory_space<vmem>>, vector<8x1xf32>
    tpu.vector_store %arg8[%c0_15, %c0_16], %27 {strides = array<i32>} : memref<8x1xf32, #tpu.memory_space<vmem>>, vector<8x1xf32>,
    %c0_i32_17 = arith.constant 0 : i32
    %29 = arith.cmpi eq, %arg1, %c0_i32_17 : i32
    %30 = arith.extui %29 : i1 to i32
    %c0_i32_18 = arith.constant 0 : i32
    %31 = arith.cmpi ne, %30, %c0_i32_18 : i32
    scf.if %31 {
      %c0_19 = arith.constant 0 : index
      %c0_20 = arith.constant 0 : index
      %32 = vector.load %arg7[%c0_19, %c0_20] : memref<8x1xf32, #tpu.memory_space<vmem>>, vector<8x1xf32>
      %cst_21 = arith.constant 1.000000e+00 : f32
      %33 = vector.broadcast %cst_21 : f32 to vector<8x1xf32>
      %34 = arith.subf %32, %33 : vector<8x1xf32>
      %cst_22 = arith.constant 1.000000e-30 : f32
      %35 = vector.broadcast %cst_22 : f32 to vector<8x1xf32>
      %36 = arith.maximumf %34, %35 : vector<8x1xf32>
      %37 = math.log %36 : vector<8x1xf32>
      %cst_23 = arith.constant 2.000000e+00 : f32
      %38 = vector.broadcast %cst_23 : f32 to vector<8x1xf32>
      %39 = arith.addf %38, %37 : vector<8x1xf32>
      %c0_24 = arith.constant 0 : index
      %c0_25 = arith.constant 0 : index
      %40 = vector.load %arg8[%c0_24, %c0_25] : memref<8x1xf32, #tpu.memory_space<vmem>>, vector<8x1xf32>
      %cst_26 = arith.constant 2.000000e+00 : f32
      %41 = vector.broadcast %cst_26 : f32 to vector<8x1xf32>
      %42 = arith.mulf %40, %41 : vector<8x1xf32>
      %43 = arith.subf %39, %42 : vector<8x1xf32>
      %c0_27 = arith.constant 0 : index
      %c0_28 = arith.constant 0 : index
      %44 = vector.load %arg4[%c0_27, %c0_28] : memref<8x1xf32, #tpu.memory_space<vmem>>, vector<8x1xf32>
      tpu.vector_store %arg4[%c0_27, %c0_28], %43 {strides = array<i32>} : memref<8x1xf32, #tpu.memory_space<vmem>>, vector<8x1xf32>,
    } else {
    }
    return
  }
  func.func @transform_0(%arg0: i32, %arg1: i32) -> (i32, i32) {
    %c0_i32 = arith.constant 0 : i32
    %c0_i32_0 = arith.constant 0 : i32
    return %arg0, %c0_i32 : i32, i32
  }
  func.func @transform_1(%arg0: i32, %arg1: i32) -> (i32, i32) {
    %c0_i32 = arith.constant 0 : i32
    %c0_i32_0 = arith.constant 0 : i32
    return %arg1, %c0_i32 : i32, i32
  }
  func.func @transform_2(%arg0: i32, %arg1: i32) -> (i32, i32) {
    %c0_i32 = arith.constant 0 : i32
    %c0_i32_0 = arith.constant 0 : i32
    return %arg0, %c0_i32 : i32, i32
  }
}

</mosaic_0001>

<llo_original>
// kernel: tpu_custom_call.1
$region0: #{tpu_custom_call.1}
  #allocation0 [shape = 'u32[]', space=smem, size = 0x4, offset = 0x4, fixed_abs, tag = 'smem constant byte address 0x4 - core index']
  #allocation1 [shape = 'u32[72,128]{1,0:T(1,128)}', space=vmem, size = 0x9000, scoped, tag = 'internal scratch']
  #allocation2 [shape = 'f32[8,32]{1,0:T(8,128)}', space=vmem, size = 0x1000, scoped, tag = 'scratch operand']
  #allocation3 [shape = 'bf16[8,32]{1,0:T(8,128)(2,1)}', space=vmem, size = 0x800, scoped, tag = 'scratch operand']
  #allocation4 [shape = 'f32[8,1]{1,0:T(8,128)}', space=vmem, size = 0x1000, scoped, tag = 'scratch operand']
  #allocation5 [shape = 'f32[8,1]{1,0:T(8,128)}', space=vmem, size = 0x1000, scoped, tag = 'scratch operand']
  %s0 = inlined_call_operand.hbm [shape: f32[8,32], index: 0, kind: input, shape index: {}]
  %s1 = inlined_call_operand.hbm [shape: f32[8,32], index: 1, kind: input, shape index: {}]
  %s2 = inlined_call_operand.vmem [shape: f32[8,1], index: 2, kind: output, shape index: {}]
  %s3 = sld [smem:[#allocation0]]
  $region34: #{tpu_custom_call.1} parent=0
    _
  %s5 = ssub.s32 1, %s3
  %s6 = scalar_select 0, %s5, %s3
  $region1: #{tpu_custom_call.1} parent=0
    #allocation6 [shape = 'u8[4096]{0}', space=vmem, size = 0x1000, scoped, tag = 'input window, operand 0, single buffered']
    #allocation7 [shape = 's32[1]{0}', space=sflag, size = 0x4, scoped, tag = 'scoped memory for tpu_custom_call.1']
    #allocation8 [shape = 'u8[4096]{0}', space=vmem, size = 0x1000, scoped, tag = 'input window, operand 1, single buffered']
    #allocation9 [shape = 's32[1]{0}', space=sflag, size = 0x4, scoped, tag = 'scoped memory for tpu_custom_call.1']
    %7 = vsyncpa [#allocation7], 0
    %8 = vsyncpa [#allocation9], 0
    // Predicated region
    $region2: #{tpu_custom_call.1} parent=1 // pred_check
      _
    $region3: #{tpu_custom_call.1} parent=1 // pred_check_branch
      %10 = sbr.rel (0) target = $region5
    $region4: #{tpu_custom_call.1} parent=1 // pred_region
      %12 = vsyncadd [#allocation7], 0
      %s14 = sshll.u32 %s0, 4
      %s15 = int_to_ptr.hbm [resolvable:$true] %s14
      %s16 = sshll.u32 [#allocation6], 4
      %s17 = int_to_ptr.vmem [resolvable:$true] %s16
      %19 = dma.hbm_to_vmem [thread:$0]  %s15, 128, %s17, [#allocation7]
    $region5: #{tpu_custom_call.1} parent=1 // pred_fallthru
      _
    // Predicated region
    $region6: #{tpu_custom_call.1} parent=1 // pred_check
      _
    $region7: #{tpu_custom_call.1} parent=1 // pred_check_branch
      %21 = sbr.rel (0) target = $region9
    $region8: #{tpu_custom_call.1} parent=1 // pred_region
      %23 = vsyncadd [#allocation9], 0
      %s25 = sshll.u32 %s1, 4
      %s26 = int_to_ptr.hbm [resolvable:$true] %s25
      %s27 = sshll.u32 [#allocation8], 4
      %s28 = int_to_ptr.vmem [resolvable:$true] %s27
      %30 = dma.hbm_to_vmem [thread:$0]  %s26, 128, %s28, [#allocation9]
    $region9: #{tpu_custom_call.1} parent=1 // pred_fallthru
      _
    // Predicated region
    $region10: #{tpu_custom_call.1} parent=1 // pred_check
      _
    $region11: #{tpu_custom_call.1} parent=1 // pred_check_branch
      %32 = sbr.rel (0) target = $region13
    $region12: #{tpu_custom_call.1} parent=1 // pred_region
      %34 = dma.done [#allocation7], 128
    $region13: #{tpu_custom_call.1} parent=1 // pred_fallthru
      _
    // Predicated region
    $region14: #{tpu_custom_call.1} parent=1 // pred_check
      _
    $region15: #{tpu_custom_call.1} parent=1 // pred_check_branch
      %36 = sbr.rel (0) target = $region17
    $region16: #{tpu_custom_call.1} parent=1 // pred_region
      %38 = dma.done [#allocation9], 128
    $region17: #{tpu_custom_call.1} parent=1 // pred_fallthru
      _
    %p40 = scmp.eq.s32.totalorder 0, 0
    // Predicated region
    $region18: #{tpu_custom_call.1} parent=1 // pred_check
      %p41 = pneg %p40
    $region19: #{tpu_custom_call.1} parent=1 // pred_check_branch
      %43 = sbr.rel (%p41) target = $region21
    $region20: #{tpu_custom_call.1} parent=1 // pred_region
      %v44 = vld [vmem:[#allocation6] sm:$0xff]
      %v45 = vmul.f32 %v44, %v44
      %vm46 = vcmask 261120
      %v47 = vsel %vm46, %v45, 0.0
      %48 = vadd.xlane.f32.xlu0 %v47
      %v49 = vpop.xlane.xlu0 %48
      %v50 = vrsqrt.pop %v49
      %v51 = vmul.f32 %v50, %v49
      %v52 = vmul.f32 %v51, %v50
      %v53 = vmul.f32 0.5, %v52
      %v54 = vsub.f32 1.5, %v53
      %v55 = vmul.f32 %v50, %v54
      %vm56 = vweird.f32 %v49
      %vm57 = vweird.f32 %v50
      %vm58 = vmor %vm56, %vm57
      %v59 = vsel %vm58, %v50, %v55
      %v60 = vmul.f32 %v44, %v59
      %61 = vst.msk [vmem:[#allocation2] sm:$0xff] %vm46, %v60
      %v62 = vpack.c.bf16 %v60, %v60
      %vm63 = vcmask 257024
      %64 = vst.msk [vmem:[#allocation3] sm:$0xf] %vm63, %v62
      %vm65 = vcmask 7168
      %66 = vst.msk [vmem:[#allocation4] sm:$0xff] %vm65, 0.0
    $region21: #{tpu_custom_call.1} parent=1 // pred_fallthru
      _
    %v67 = vld [vmem:[#allocation8] sm:$0xff]
    %v68 = vmul.f32 %v67, %v67
    %vm69 = vcmask 261120
    %v70 = vsel %vm69, %v68, 0.0
    %71 = vadd.xlane.f32.xlu0 %v70
    %v72 = vpop.xlane.xlu0 %71
    %v73 = vrsqrt.pop %v72
    %v74 = vmul.f32 %v73, %v72
    %v75 = vmul.f32 %v74, %v73
    %v76 = vmul.f32 0.5, %v75
    %v77 = vsub.f32 1.5, %v76
    %v78 = vmul.f32 %v73, %v77
    %vm79 = vweird.f32 %v72
    %vm80 = vweird.f32 %v73
    %vm81 = vmor %vm79, %vm80
    %v82 = vsel %vm81, %v73, %v78
    %v83 = vmul.f32 %v67, %v82
    %v84 = vld [vmem:[#allocation3] sm:$0xf]
    %v85 = vpack.c.bf16 %v83, %v83
    %v87 = vsel %vm69, %v84, 0
    %v90 = vsel %vm69, %v85, 0
    %92 = vmatpush.bf16.xpose.msra.mxu0 0
    %93 = vmatpush.bf16.xpose.msra.mxu0 0
    %94 = vmatpush.bf16.xpose.msra.mxu0 0
    %95 = vmatpush.bf16.xpose.msra.mxu0 0
    %96 = vmatpush.bf16.xpose.msra.mxu0 0
    %97 = vmatpush.bf16.xpose.msra.mxu0 0
    %98 = vmatpush.bf16.xpose.msra.mxu0 0
    %99 = vmatpush.bf16.xpose.msra.mxu0 %v90
    %100 = vmatmul.bf16.gmra.mxu0 %v87
    %v101 = vpop.f32.mrf.mxu0
    %v102 = vadd.f32 0.0, %v101
    %v103 = vpop.f32.mrf.mxu0
    %104 = vdwg.mxu0
    %v105 = vld [vmem:[#allocation4] sm:$0xff]
    %v106 = vsub.f32 %v102, 1.0
    %v107 = vmul.f32 %v106, 2.0
    %v108 = vmul.f32 %v107, 1.442695
    %v109 = vpow.pop %v108
    %vm110 = vcmask 64512
    %v111 = vsel %vm110, %v109, 0.0
    %112 = vadd.xlane.f32.xlu0 %v111
    %v113 = vpop.xlane.xlu0 %112
    %v114 = vadd.f32 %v105, %v113
    %vm115 = vcmask 7168
    %116 = vst.msk [vmem:[#allocation4] sm:$0xff] %vm115, %v114
    %v117 = vld [vmem:[#allocation2] sm:$0xff]
    %v118 = vrot.slane %v83, 4
    %v119 = vmul.f32 %v117, %v118
    %v120 = vsel %vm69, %v119, 0.0
    %121 = vadd.xlane.f32.xlu0 %v120
    %v122 = vpop.xlane.xlu0 %121
    %123 = vst.msk [vmem:[#allocation5] sm:$0xff] %vm115, %v122
    // Predicated region
    $region22: #{tpu_custom_call.1} parent=1 // pred_check
      %p124 = pneg %p40
    $region23: #{tpu_custom_call.1} parent=1 // pred_check_branch
      %126 = sbr.rel (%p124) target = $region25
    $region24: #{tpu_custom_call.1} parent=1 // pred_region
      %v127 = vld [vmem:[#allocation4] sm:$0xff]
      %v128 = vsub.f32 %v127, 1.0
      %v129 = vmax.f32 %v128, 1e-30
      %v130 = vlog2.pop %v129
      %v131 = vmul.f32 %v130, 0.6931472
      %v132 = vadd.f32 %v131, 2.0
      %v133 = vld [vmem:[#allocation5] sm:$0xff]
      %v134 = vmul.f32 %v133, 2.0
      %v135 = vsub.f32 %v132, %v134
      %136 = vst.msk [vmem:[%s2] sm:$0xff] %vm115, %v135
    $region25: #{tpu_custom_call.1} parent=1 // pred_fallthru
      _
    // Predicated region
    $region26: #{tpu_custom_call.1} parent=1 // pred_check
      _
    $region27: #{tpu_custom_call.1} parent=1 // pred_check_branch
      %138 = sbr.rel (0) target = $region29
    $region28: #{tpu_custom_call.1} parent=1 // pred_region
      _
    $region29: #{tpu_custom_call.1} parent=1 // pred_fallthru
      _
    // Predicated region
    $region30: #{tpu_custom_call.1} parent=1 // pred_check
      _
    $region31: #{tpu_custom_call.1} parent=1 // pred_check_branch
      %140 = sbr.rel (0) target = $region33
    $region32: #{tpu_custom_call.1} parent=1 // pred_region
      _
    $region33: #{tpu_custom_call.1} parent=1 // pred_fallthru
      _
    %141 = vsyncpa [#allocation7], 1
    %142 = vsyncpa [#allocation9], 1

</llo_original>
